<compile_context>
chip_gen: v7x
topology: tpu7x:2x2x1
jax: 0.10.0
libtpu: 0.0.40
codegen_flags: <defaults>
</compile_context>

<pallas_src>
import jax
import jax.numpy as jnp
from jax.experimental import pallas as pl
from jax.experimental.pallas import tpu as pltpu

BN_EPS = 1e-5


def _dla_kernel(lbl_ref, x_ref, wb_ref, o_ref):
    C = o_ref.shape[1]
    x = x_ref[...].astype(jnp.float32)

    # Rebuild the strict one-hot mask from integer labels: (B, C) bool.
    labels = lbl_ref[...]                                        # (B, 1) int32
    class_ids = jax.lax.broadcasted_iota(jnp.int32, x.shape, 1)  # (B, C)
    onehot = class_ids == labels

    def batchnorm(h):
        # BatchNorm1d(track_running_stats=False): batch stats, biased variance,
        # affine weight=1 / bias=0 (PyTorch default init). One-pass stats with
        # a clamp so f32 cancellation can never produce rsqrt(<0).
        mean = jnp.mean(h, axis=0, keepdims=True)
        mean_sq = jnp.mean(h * h, axis=0, keepdims=True)
        var = jnp.maximum(mean_sq - mean * mean, 0.0)
        return (h - mean) * jax.lax.rsqrt(var + BN_EPS)

    def custom_add(h, factor):
        # PyTorch: out = inverse(y)*h ; out_ = y * (max|h| over classes)*factor;
        # forward adds them.  With a strict one-hot this is exactly a select.
        max_value = jnp.max(jnp.abs(h), axis=1, keepdims=True) * factor
        return jnp.where(onehot, max_value, h)

    def linear(h, idx):
        w = wb_ref[idx, :C, :]            # (C, C), pre-transposed -> (in, out)
        b = wb_ref[idx, C:C + 1, :]       # (1, C) bias row folded into the slab
        return jnp.dot(h, w, preferred_element_type=jnp.float32) + b

    def dla_block(h, widx, factor):
        h = custom_add(batchnorm(linear(h, widx)), factor)
        h = custom_add(batchnorm(linear(h, widx + 1)), factor)
        # TODO(synk): PyTorch's in-forward `assert argmax(out)==argmax(y)` is a
        # host-side check; it is verified outside the kernel in __main__.
        return h

    h = dla_block(x, 0, jnp.float32(3.0))
    h = dla_block(h, 2, jnp.float32(4.0))

    # Softmax over dim=1 (classes).
    m = jnp.max(h, axis=1, keepdims=True)
    e = jnp.exp(h - m)
    s = jnp.sum(e, axis=1, keepdims=True)
    r = pl.reciprocal(s, approx=True)     # EUP vrcp (free slot next to exp)
    r = r * (2.0 - s * r)                 # one Newton step: sum-to-1 <= 1e-5
    o_ref[...] = (e * r).astype(o_ref.dtype)


def pack_params(params, classes):
    """Done ONCE at init: fold the 4 weights (transposed to (in,out)) and their
    biases into a single (4, rows, C) slab, rows padded to a multiple of 8."""
    C = classes
    rows = -(-(C + 1) // 8) * 8           # ceil(C+1, 8) * 8  -> 24 for C=16
    wb = jnp.zeros((4, rows, C), dtype=jnp.float32)
    ws = [params["w1a"], params["w2a"], params["w1b"], params["w2b"]]
    bs = [params["b1a"], params["b2a"], params["b1b"], params["b2b"]]
    for i, (w, b) in enumerate(zip(ws, bs)):
        wb = wb.at[i, :C, :].set(w.T.astype(jnp.float32))
        wb = wb.at[i, C, :].set(b.astype(jnp.float32))
    return wb


def dla_forward(x, labels, wb_packed):
    """x: (B, C) f32.  labels: (B, 1) int32.  wb_packed: (4, rows, C) f32
    from pack_params() (pre-packed once; nothing is re-packed per call)."""
    B, C = x.shape
    vmem = pl.BlockSpec(memory_space=pltpu.MemorySpace.VMEM)
    return pl.pallas_call(
        _dla_kernel,
        out_shape=jax.ShapeDtypeStruct((B, C), jnp.float32),
        in_specs=[vmem, vmem, vmem],
        out_specs=vmem,
    )(labels, x, wb_packed)


dla_forward = jax.jit(dla_forward)


def init_params(key, classes):
    # Matches dla._init_weights: Linear.weight ~ N(0,1), bias = 0.
    ks = jax.random.split(key, 4)
    p = {}
    for name, k in zip(["w1a", "w2a", "w1b", "w2b"], ks):
        p[name] = jax.random.normal(k, (classes, classes), dtype=jnp.float32)
    for name in ["b1a", "b2a", "b1b", "b2b"]:
        p[name] = jnp.zeros((classes,), dtype=jnp.float32)
    return p


if __name__ == "__main__":
    key = jax.random.PRNGKey(0)
    k_x, k_lbl, k_p = jax.random.split(key, 3)

    batch, classes = 8, 16
    x = jax.random.normal(k_x, (batch, classes), dtype=jnp.float32)
    labels = jax.random.randint(k_lbl, (batch,), 0, classes).astype(jnp.int32)
    labels_col = labels.reshape(batch, 1)               # (B,1) kernel input
    y = jax.nn.one_hot(labels, classes, dtype=jnp.float32)  # for host checks

    params = init_params(k_p, classes)
    wb_packed = pack_params(params, classes)            # hoisted: done once

    out = dla_forward(x, labels_col, wb_packed)
    out = jax.block_until_ready(out)

    # Host-side equivalents of the module's asserts.
    assert out.shape == (batch, classes)
    assert bool(jnp.all(jnp.argmax(out, axis=1) == jnp.argmax(y, axis=1)))
    assert bool(jnp.allclose(jnp.sum(out, axis=1), 1.0, atol=1e-5))

    print("KERNEL_OK")
</pallas_src>

<mosaic_0001>
module attributes {stable_mosaic.version = 11 : i64} {
  func.func @_dla_kernel(%arg0: memref<8x1xi32, #tpu.memory_space<vmem>>, %arg1: memref<8x16xf32, #tpu.memory_space<vmem>>, %arg2: memref<4x24x16xf32, #tpu.memory_space<vmem>>, %arg3: memref<8x16xf32, #tpu.memory_space<vmem>>) attributes {dimension_semantics = [], scalar_prefetch = 0 : i64, scratch_operands = 0 : i64, tpu.core_type = #tpu.core_type<tc>} {
    %c0 = arith.constant 0 : index
    %c0_0 = arith.constant 0 : index
    %0 = vector.load %arg1[%c0, %c0_0] : memref<8x16xf32, #tpu.memory_space<vmem>>, vector<8x16xf32>
    %c0_1 = arith.constant 0 : index
    %c0_2 = arith.constant 0 : index
    %1 = vector.load %arg0[%c0_1, %c0_2] : memref<8x1xi32, #tpu.memory_space<vmem>>, vector<8x1xi32>
    %2 = tpu.iota {dimensions = array<i32: 1>} : vector<8x16xi32>
    %3 = vector.broadcast %1 : vector<8x1xi32> to vector<8x16xi32>
    %4 = arith.cmpi eq, %2, %3 : vector<8x16xi32>
    %c0_3 = arith.constant 0 : index
    %c0_4 = arith.constant 0 : index
    %c0_5 = arith.constant 0 : index
    %5 = vector.load %arg2[%c0_3, %c0_4, %c0_5] : memref<4x24x16xf32, #tpu.memory_space<vmem>>, vector<1x16x16xf32>
    %6 = vector.shape_cast %5 : vector<1x16x16xf32> to vector<16x16xf32>
    %c0_6 = arith.constant 0 : index
    %c16 = arith.constant 16 : index
    %c0_7 = arith.constant 0 : index
    %7 = vector.load %arg2[%c0_6, %c16, %c0_7] : memref<4x24x16xf32, #tpu.memory_space<vmem>>, vector<1x1x16xf32>
    %8 = vector.shape_cast %7 : vector<1x1x16xf32> to vector<1x16xf32>
    %cst = arith.constant dense<0.000000e+00> : vector<8x16xf32>
    %9 = tpu.matmul %0, %6, %cst {dimension_numbers = #tpu.dot_dimension_numbers<[1], [0], [0], [1], [0, 0, 1, 1], [], []>} : vector<8x16xf32>, vector<16x16xf32>, vector<8x16xf32> -> vector<8x16xf32>
    %10 = vector.broadcast %8 : vector<1x16xf32> to vector<8x16xf32>
    %11 = arith.addf %9, %10 : vector<8x16xf32>
    %cst_8 = arith.constant dense<0.000000e+00> : vector<16xf32>
    %12 = vector.multi_reduction <add>, %11, %cst_8 [0] : vector<8x16xf32> to vector<16xf32>
    %13 = vector.shape_cast %12 : vector<16xf32> to vector<1x16xf32>
    %cst_9 = arith.constant 8.000000e+00 : f32
    %14 = vector.broadcast %cst_9 : f32 to vector<1x16xf32>
    %15 = arith.divf %13, %14 : vector<1x16xf32>
    %16 = arith.mulf %11, %11 : vector<8x16xf32>
    %cst_10 = arith.constant dense<0.000000e+00> : vector<16xf32>
    %17 = vector.multi_reduction <add>, %16, %cst_10 [0] : vector<8x16xf32> to vector<16xf32>
    %18 = vector.shape_cast %17 : vector<16xf32> to vector<1x16xf32>
    %cst_11 = arith.constant 8.000000e+00 : f32
    %19 = vector.broadcast %cst_11 : f32 to vector<1x16xf32>
    %20 = arith.divf %18, %19 : vector<1x16xf32>
    %21 = arith.mulf %15, %15 : vector<1x16xf32>
    %22 = arith.subf %20, %21 : vector<1x16xf32>
    %cst_12 = arith.constant 0.000000e+00 : f32
    %23 = vector.broadcast %cst_12 : f32 to vector<1x16xf32>
    %24 = arith.maximumf %22, %23 : vector<1x16xf32>
    %25 = vector.broadcast %15 : vector<1x16xf32> to vector<8x16xf32>
    %26 = arith.subf %11, %25 : vector<8x16xf32>
    %cst_13 = arith.constant 9.99999974E-6 : f32
    %27 = vector.broadcast %cst_13 : f32 to vector<1x16xf32>
    %28 = arith.addf %24, %27 : vector<1x16xf32>
    %29 = math.rsqrt %28 : vector<1x16xf32>
    %30 = vector.broadcast %29 : vector<1x16xf32> to vector<8x16xf32>
    %31 = arith.mulf %26, %30 : vector<8x16xf32>
    %32 = math.absf %31 : vector<8x16xf32>
    %cst_14 = arith.constant dense<0xFF800000> : vector<8xf32>
    %33 = vector.multi_reduction <maximumf>, %32, %cst_14 [1] : vector<8x16xf32> to vector<8xf32>
    %34 = vector.shape_cast %33 : vector<8xf32> to vector<8x1xf32>
    %cst_15 = arith.constant 3.000000e+00 : f32
    %35 = vector.broadcast %cst_15 : f32 to vector<8x1xf32>
    %36 = arith.mulf %34, %35 : vector<8x1xf32>
    %37 = vector.shape_cast %36 : vector<8x1xf32> to vector<8x1xf32>
    %38 = vector.broadcast %37 : vector<8x1xf32> to vector<8x16xf32>
    %39 = arith.select %4, %38, %31 : vector<8x16xi1>, vector<8x16xf32>
    %c1 = arith.constant 1 : index
    %c0_16 = arith.constant 0 : index
    %c0_17 = arith.constant 0 : index
    %40 = vector.load %arg2[%c1, %c0_16, %c0_17] : memref<4x24x16xf32, #tpu.memory_space<vmem>>, vector<1x16x16xf32>
    %41 = vector.shape_cast %40 : vector<1x16x16xf32> to vector<16x16xf32>
    %c1_18 = arith.constant 1 : index
    %c16_19 = arith.constant 16 : index
    %c0_20 = arith.constant 0 : index
    %42 = vector.load %arg2[%c1_18, %c16_19, %c0_20] : memref<4x24x16xf32, #tpu.memory_space<vmem>>, vector<1x1x16xf32>
    %43 = vector.shape_cast %42 : vector<1x1x16xf32> to vector<1x16xf32>
    %cst_21 = arith.constant dense<0.000000e+00> : vector<8x16xf32>
    %44 = tpu.matmul %39, %41, %cst_21 {dimension_numbers = #tpu.dot_dimension_numbers<[1], [0], [0], [1], [0, 0, 1, 1], [], []>} : vector<8x16xf32>, vector<16x16xf32>, vector<8x16xf32> -> vector<8x16xf32>
    %45 = vector.broadcast %43 : vector<1x16xf32> to vector<8x16xf32>
    %46 = arith.addf %44, %45 : vector<8x16xf32>
    %cst_22 = arith.constant dense<0.000000e+00> : vector<16xf32>
    %47 = vector.multi_reduction <add>, %46, %cst_22 [0] : vector<8x16xf32> to vector<16xf32>
    %48 = vector.shape_cast %47 : vector<16xf32> to vector<1x16xf32>
    %cst_23 = arith.constant 8.000000e+00 : f32
    %49 = vector.broadcast %cst_23 : f32 to vector<1x16xf32>
    %50 = arith.divf %48, %49 : vector<1x16xf32>
    %51 = arith.mulf %46, %46 : vector<8x16xf32>
    %cst_24 = arith.constant dense<0.000000e+00> : vector<16xf32>
    %52 = vector.multi_reduction <add>, %51, %cst_24 [0] : vector<8x16xf32> to vector<16xf32>
    %53 = vector.shape_cast %52 : vector<16xf32> to vector<1x16xf32>
    %cst_25 = arith.constant 8.000000e+00 : f32
    %54 = vector.broadcast %cst_25 : f32 to vector<1x16xf32>
    %55 = arith.divf %53, %54 : vector<1x16xf32>
    %56 = arith.mulf %50, %50 : vector<1x16xf32>
    %57 = arith.subf %55, %56 : vector<1x16xf32>
    %cst_26 = arith.constant 0.000000e+00 : f32
    %58 = vector.broadcast %cst_26 : f32 to vector<1x16xf32>
    %59 = arith.maximumf %57, %58 : vector<1x16xf32>
    %60 = vector.broadcast %50 : vector<1x16xf32> to vector<8x16xf32>
    %61 = arith.subf %46, %60 : vector<8x16xf32>
    %cst_27 = arith.constant 9.99999974E-6 : f32
    %62 = vector.broadcast %cst_27 : f32 to vector<1x16xf32>
    %63 = arith.addf %59, %62 : vector<1x16xf32>
    %64 = math.rsqrt %63 : vector<1x16xf32>
    %65 = vector.broadcast %64 : vector<1x16xf32> to vector<8x16xf32>
    %66 = arith.mulf %61, %65 : vector<8x16xf32>
    %67 = math.absf %66 : vector<8x16xf32>
    %cst_28 = arith.constant dense<0xFF800000> : vector<8xf32>
    %68 = vector.multi_reduction <maximumf>, %67, %cst_28 [1] : vector<8x16xf32> to vector<8xf32>
    %69 = vector.shape_cast %68 : vector<8xf32> to vector<8x1xf32>
    %cst_29 = arith.constant 3.000000e+00 : f32
    %70 = vector.broadcast %cst_29 : f32 to vector<8x1xf32>
    %71 = arith.mulf %69, %70 : vector<8x1xf32>
    %72 = vector.shape_cast %71 : vector<8x1xf32> to vector<8x1xf32>
    %73 = vector.broadcast %72 : vector<8x1xf32> to vector<8x16xf32>
    %74 = arith.select %4, %73, %66 : vector<8x16xi1>, vector<8x16xf32>
    %c2 = arith.constant 2 : index
    %c0_30 = arith.constant 0 : index
    %c0_31 = arith.constant 0 : index
    %75 = vector.load %arg2[%c2, %c0_30, %c0_31] : memref<4x24x16xf32, #tpu.memory_space<vmem>>, vector<1x16x16xf32>
    %76 = vector.shape_cast %75 : vector<1x16x16xf32> to vector<16x16xf32>
    %c2_32 = arith.constant 2 : index
    %c16_33 = arith.constant 16 : index
    %c0_34 = arith.constant 0 : index
    %77 = vector.load %arg2[%c2_32, %c16_33, %c0_34] : memref<4x24x16xf32, #tpu.memory_space<vmem>>, vector<1x1x16xf32>
    %78 = vector.shape_cast %77 : vector<1x1x16xf32> to vector<1x16xf32>
    %cst_35 = arith.constant dense<0.000000e+00> : vector<8x16xf32>
    %79 = tpu.matmul %74, %76, %cst_35 {dimension_numbers = #tpu.dot_dimension_numbers<[1], [0], [0], [1], [0, 0, 1, 1], [], []>} : vector<8x16xf32>, vector<16x16xf32>, vector<8x16xf32> -> vector<8x16xf32>
    %80 = vector.broadcast %78 : vector<1x16xf32> to vector<8x16xf32>
    %81 = arith.addf %79, %80 : vector<8x16xf32>
    %cst_36 = arith.constant dense<0.000000e+00> : vector<16xf32>
    %82 = vector.multi_reduction <add>, %81, %cst_36 [0] : vector<8x16xf32> to vector<16xf32>
    %83 = vector.shape_cast %82 : vector<16xf32> to vector<1x16xf32>
    %cst_37 = arith.constant 8.000000e+00 : f32
    %84 = vector.broadcast %cst_37 : f32 to vector<1x16xf32>
    %85 = arith.divf %83, %84 : vector<1x16xf32>
    %86 = arith.mulf %81, %81 : vector<8x16xf32>
    %cst_38 = arith.constant dense<0.000000e+00> : vector<16xf32>
    %87 = vector.multi_reduction <add>, %86, %cst_38 [0] : vector<8x16xf32> to vector<16xf32>
    %88 = vector.shape_cast %87 : vector<16xf32> to vector<1x16xf32>
    %cst_39 = arith.constant 8.000000e+00 : f32
    %89 = vector.broadcast %cst_39 : f32 to vector<1x16xf32>
    %90 = arith.divf %88, %89 : vector<1x16xf32>
    %91 = arith.mulf %85, %85 : vector<1x16xf32>
    %92 = arith.subf %90, %91 : vector<1x16xf32>
    %cst_40 = arith.constant 0.000000e+00 : f32
    %93 = vector.broadcast %cst_40 : f32 to vector<1x16xf32>
    %94 = arith.maximumf %92, %93 : vector<1x16xf32>
    %95 = vector.broadcast %85 : vector<1x16xf32> to vector<8x16xf32>
    %96 = arith.subf %81, %95 : vector<8x16xf32>
    %cst_41 = arith.constant 9.99999974E-6 : f32
    %97 = vector.broadcast %cst_41 : f32 to vector<1x16xf32>
    %98 = arith.addf %94, %97 : vector<1x16xf32>
    %99 = math.rsqrt %98 : vector<1x16xf32>
    %100 = vector.broadcast %99 : vector<1x16xf32> to vector<8x16xf32>
    %101 = arith.mulf %96, %100 : vector<8x16xf32>
    %102 = math.absf %101 : vector<8x16xf32>
    %cst_42 = arith.constant dense<0xFF800000> : vector<8xf32>
    %103 = vector.multi_reduction <maximumf>, %102, %cst_42 [1] : vector<8x16xf32> to vector<8xf32>
    %104 = vector.shape_cast %103 : vector<8xf32> to vector<8x1xf32>
    %cst_43 = arith.constant 4.000000e+00 : f32
    %105 = vector.broadcast %cst_43 : f32 to vector<8x1xf32>
    %106 = arith.mulf %104, %105 : vector<8x1xf32>
    %107 = vector.shape_cast %106 : vector<8x1xf32> to vector<8x1xf32>
    %108 = vector.broadcast %107 : vector<8x1xf32> to vector<8x16xf32>
    %109 = arith.select %4, %108, %101 : vector<8x16xi1>, vector<8x16xf32>
    %c3 = arith.constant 3 : index
    %c0_44 = arith.constant 0 : index
    %c0_45 = arith.constant 0 : index
    %110 = vector.load %arg2[%c3, %c0_44, %c0_45] : memref<4x24x16xf32, #tpu.memory_space<vmem>>, vector<1x16x16xf32>
    %111 = vector.shape_cast %110 : vector<1x16x16xf32> to vector<16x16xf32>
    %c3_46 = arith.constant 3 : index
    %c16_47 = arith.constant 16 : index
    %c0_48 = arith.constant 0 : index
    %112 = vector.load %arg2[%c3_46, %c16_47, %c0_48] : memref<4x24x16xf32, #tpu.memory_space<vmem>>, vector<1x1x16xf32>
    %113 = vector.shape_cast %112 : vector<1x1x16xf32> to vector<1x16xf32>
    %cst_49 = arith.constant dense<0.000000e+00> : vector<8x16xf32>
    %114 = tpu.matmul %109, %111, %cst_49 {dimension_numbers = #tpu.dot_dimension_numbers<[1], [0], [0], [1], [0, 0, 1, 1], [], []>} : vector<8x16xf32>, vector<16x16xf32>, vector<8x16xf32> -> vector<8x16xf32>
    %115 = vector.broadcast %113 : vector<1x16xf32> to vector<8x16xf32>
    %116 = arith.addf %114, %115 : vector<8x16xf32>
    %cst_50 = arith.constant dense<0.000000e+00> : vector<16xf32>
    %117 = vector.multi_reduction <add>, %116, %cst_50 [0] : vector<8x16xf32> to vector<16xf32>
    %118 = vector.shape_cast %117 : vector<16xf32> to vector<1x16xf32>
    %cst_51 = arith.constant 8.000000e+00 : f32
    %119 = vector.broadcast %cst_51 : f32 to vector<1x16xf32>
    %120 = arith.divf %118, %119 : vector<1x16xf32>
    %121 = arith.mulf %116, %116 : vector<8x16xf32>
    %cst_52 = arith.constant dense<0.000000e+00> : vector<16xf32>
    %122 = vector.multi_reduction <add>, %121, %cst_52 [0] : vector<8x16xf32> to vector<16xf32>
    %123 = vector.shape_cast %122 : vector<16xf32> to vector<1x16xf32>
    %cst_53 = arith.constant 8.000000e+00 : f32
    %124 = vector.broadcast %cst_53 : f32 to vector<1x16xf32>
    %125 = arith.divf %123, %124 : vector<1x16xf32>
    %126 = arith.mulf %120, %120 : vector<1x16xf32>
    %127 = arith.subf %125, %126 : vector<1x16xf32>
    %cst_54 = arith.constant 0.000000e+00 : f32
    %128 = vector.broadcast %cst_54 : f32 to vector<1x16xf32>
    %129 = arith.maximumf %127, %128 : vector<1x16xf32>
    %130 = vector.broadcast %120 : vector<1x16xf32> to vector<8x16xf32>
    %131 = arith.subf %116, %130 : vector<8x16xf32>
    %cst_55 = arith.constant 9.99999974E-6 : f32
    %132 = vector.broadcast %cst_55 : f32 to vector<1x16xf32>
    %133 = arith.addf %129, %132 : vector<1x16xf32>
    %134 = math.rsqrt %133 : vector<1x16xf32>
    %135 = vector.broadcast %134 : vector<1x16xf32> to vector<8x16xf32>
    %136 = arith.mulf %131, %135 : vector<8x16xf32>
    %137 = math.absf %136 : vector<8x16xf32>
    %cst_56 = arith.constant dense<0xFF800000> : vector<8xf32>
    %138 = vector.multi_reduction <maximumf>, %137, %cst_56 [1] : vector<8x16xf32> to vector<8xf32>
    %139 = vector.shape_cast %138 : vector<8xf32> to vector<8x1xf32>
    %cst_57 = arith.constant 4.000000e+00 : f32
    %140 = vector.broadcast %cst_57 : f32 to vector<8x1xf32>
    %141 = arith.mulf %139, %140 : vector<8x1xf32>
    %142 = vector.shape_cast %141 : vector<8x1xf32> to vector<8x1xf32>
    %143 = vector.broadcast %142 : vector<8x1xf32> to vector<8x16xf32>
    %144 = arith.select %4, %143, %136 : vector<8x16xi1>, vector<8x16xf32>
    %cst_58 = arith.constant dense<0xFF800000> : vector<8xf32>
    %145 = vector.multi_reduction <maximumf>, %144, %cst_58 [1] : vector<8x16xf32> to vector<8xf32>
    %146 = vector.shape_cast %145 : vector<8xf32> to vector<8x1xf32>
    %147 = vector.broadcast %146 : vector<8x1xf32> to vector<8x16xf32>
    %148 = arith.subf %144, %147 : vector<8x16xf32>
    %149 = math.exp %148 : vector<8x16xf32>
    %cst_59 = arith.constant dense<0.000000e+00> : vector<8xf32>
    %150 = vector.multi_reduction <add>, %149, %cst_59 [1] : vector<8x16xf32> to vector<8xf32>
    %151 = vector.shape_cast %150 : vector<8xf32> to vector<8x1xf32>
    %152 = tpu.reciprocal %151 {approx = true} : vector<8x1xf32> -> vector<8x1xf32>
    %153 = arith.mulf %151, %152 : vector<8x1xf32>
    %cst_60 = arith.constant 2.000000e+00 : f32
    %154 = vector.broadcast %cst_60 : f32 to vector<8x1xf32>
    %155 = arith.subf %154, %153 : vector<8x1xf32>
    %156 = arith.mulf %152, %155 : vector<8x1xf32>
    %157 = vector.broadcast %156 : vector<8x1xf32> to vector<8x16xf32>
    %158 = arith.mulf %149, %157 : vector<8x16xf32>
    %c0_61 = arith.constant 0 : index
    %c0_62 = arith.constant 0 : index
    %159 = vector.load %arg3[%c0_61, %c0_62] : memref<8x16xf32, #tpu.memory_space<vmem>>, vector<8x16xf32>
    tpu.vector_store %arg3[%c0_61, %c0_62], %158 {strides = array<i32>} : memref<8x16xf32, #tpu.memory_space<vmem>>, vector<8x16xf32>,
    return
  }
}

</mosaic_0001>

<llo_original>
// kernel: dla_forward.1
$region0: #{dla_forward.1}
  #allocation0 [shape = 'u32[]', space=smem, size = 0x4, offset = 0x4, fixed_abs, tag = 'smem constant byte address 0x4 - core index']
  #allocation1 [shape = 'u32[144,128]{1,0:T(1,128)}', space=vmem, size = 0x12000, scoped, tag = 'internal scratch']
  %s0 = inlined_call_operand.vmem [shape: s32[8,1], index: 0, kind: input, shape index: {}]
  %s1 = inlined_call_operand.vmem [shape: f32[8,16], index: 1, kind: input, shape index: {}]
  %s2 = inlined_call_operand.vmem [shape: f32[4,24,16], index: 2, kind: input, shape index: {}]
  %s3 = inlined_call_operand.hbm [shape: f32[8,16], index: 3, kind: output, shape index: {}]
  %s4 = sld [smem:[#allocation0]]
  $region22: #{dla_forward.1} parent=0
    _
  %s6 = ssub.s32 1, %s4
  %s7 = scalar_select 0, %s6, %s4
  $region1: #{dla_forward.1} parent=0
    #allocation2 [shape = 'u8[4096]{0}', space=vmem, size = 0x1000, scoped, tag = 'output window, operand 0, single buffered']
    #allocation3 [shape = 's32[1]{0}', space=sflag, size = 0x4, scoped, tag = 'scoped memory for dla_forward.1']
    %8 = vsyncpa [#allocation3], 0
    // Predicated region
    $region2: #{dla_forward.1} parent=1 // pred_check
      _
    $region3: #{dla_forward.1} parent=1 // pred_check_branch
      %10 = sbr.rel (0) target = $region5
    $region4: #{dla_forward.1} parent=1 // pred_region
      _
    $region5: #{dla_forward.1} parent=1 // pred_fallthru
      _
    // Predicated region
    $region6: #{dla_forward.1} parent=1 // pred_check
      _
    $region7: #{dla_forward.1} parent=1 // pred_check_branch
      %12 = sbr.rel (0) target = $region9
    $region8: #{dla_forward.1} parent=1 // pred_region
      _
    $region9: #{dla_forward.1} parent=1 // pred_fallthru
      _
    // Predicated region
    $region10: #{dla_forward.1} parent=1 // pred_check
      _
    $region11: #{dla_forward.1} parent=1 // pred_check_branch
      %14 = sbr.rel (0) target = $region13
    $region12: #{dla_forward.1} parent=1 // pred_region
      _
    $region13: #{dla_forward.1} parent=1 // pred_fallthru
      _
    %v15 = vld [vmem:[%s1] sm:$0xff]
    %v16 = vld [vmem:[%s0] sm:$0xff]
    %v17 = vlaneseq
    %v18 = vand.u32 %v17, 127
    %19 = vset.pattern.permute.xlu0 0
    %20 = vperm.xlu0 %19, %v16
    %v21 = vpop.permute.xlu0 %20
    %vm22 = vcmp.eq.s32.totalorder %v18, %v21
    %v23 = vld [vmem:[%s2] sm:$0xff]
    %v24 = vld [vmem:[%s2 + $0x8] sm:$0xff]
    %v25 = vld [vmem:[%s2 + $0x10] sm:$0x1]
    %v26 = vlaneseq
    %v27 = vshrl.u32 %v26, 7
    %v28 = vsub.s32 0, %v27
    %v29 = vrot.slane %v25, %v28
    %vm30 = vcmask 130048
    %v32 = vsel %vm30, %v15, 0
    %34 = vmatprep.subr.mxu0 0.0
    %35 = vmatpush1.msra.mxu0 %v23
    %36 = vmatprep.subr.mxu0 0.0
    %37 = vmatpush1.msra.mxu0 %v24
    %38 = vmatprep.subr.mxu0 0.0
    %39 = vmatpush1.msra.mxu0 0.0
    %40 = vmatprep.subr.mxu0 0.0
    %41 = vmatpush1.msra.mxu0 0.0
    %42 = vmatprep.subr.mxu0 0.0
    %43 = vmatpush1.msra.mxu0 0.0
    %44 = vmatprep.subr.mxu0 0.0
    %45 = vmatpush1.msra.mxu0 0.0
    %46 = vmatprep.subr.mxu0 0.0
    %47 = vmatpush1.msra.mxu0 0.0
    %48 = vmatprep.subr.mxu0 0.0
    %49 = vmatpush1.msra.mxu0 0.0
    %50 = vmatprep.subr.mxu0 0.0
    %51 = vmatpush1.msra.mxu0 0.0
    %52 = vmatprep.subr.mxu0 0.0
    %53 = vmatpush1.msra.mxu0 0.0
    %54 = vmatprep.subr.mxu0 0.0
    %55 = vmatpush1.msra.mxu0 0.0
    %56 = vmatprep.subr.mxu0 0.0
    %57 = vmatpush1.msra.mxu0 0.0
    %58 = vmatprep.subr.mxu0 0.0
    %59 = vmatpush1.msra.mxu0 0.0
    %60 = vmatprep.subr.mxu0 0.0
    %61 = vmatpush1.msra.mxu0 0.0
    %62 = vmatprep.subr.mxu0 0.0
    %63 = vmatpush1.msra.mxu0 0.0
    %64 = vmatprep.subr.mxu0 0.0
    %65 = vmatpush1.msra.mxu0 0.0
    %66 = vmatprep.subr.mxu0 0.0
    %67 = vmatpush1.msra.mxu0 0.0
    %68 = vmatprep.subr.mxu0 0.0
    %69 = vmatpush1.msra.mxu0 0.0
    %70 = vmatprep.subr.mxu0 0.0
    %71 = vmatpush1.msra.mxu0 0.0
    %72 = vmatprep.subr.mxu0 0.0
    %73 = vmatpush1.msra.mxu0 0.0
    %74 = vmatprep.subr.mxu0 0.0
    %75 = vmatpush1.msra.mxu0 0.0
    %76 = vmatprep.subr.mxu0 0.0
    %77 = vmatpush1.msra.mxu0 0.0
    %78 = vmatprep.subr.mxu0 0.0
    %79 = vmatpush1.msra.mxu0 0.0
    %80 = vmatprep.subr.mxu0 0.0
    %81 = vmatpush1.msra.mxu0 0.0
    %82 = vmatprep.subr.mxu0 0.0
    %83 = vmatpush1.msra.mxu0 0.0
    %84 = vmatprep.subr.mxu0 0.0
    %85 = vmatpush1.msra.mxu0 0.0
    %86 = vmatprep.subr.mxu0 0.0
    %87 = vmatpush1.msra.mxu0 0.0
    %88 = vmatprep.subr.mxu0 0.0
    %89 = vmatpush1.msra.mxu0 0.0
    %90 = vmatprep.subr.mxu0 0.0
    %91 = vmatpush1.msra.mxu0 0.0
    %92 = vmatprep.subr.mxu0 0.0
    %93 = vmatpush1.msra.mxu0 0.0
    %94 = vmatprep.subr.mxu0 0.0
    %95 = vmatpush1.msra.mxu0 0.0
    %96 = vmatprep.subr.mxu0 0.0
    %97 = vmatpush1.msra.mxu0 0.0
    %98 = vmatprep.mubr.f32.mxu0 0.0
    %99 = vmatmul.mubr.f32.gmra.mrb[0].mxu0 %v32
    %v100 = vpop.f32.mrb[0].mxu0
    %v101 = vadd.f32 %v29, %v100
    %v102 = vpop.f32.mrb[0].mxu0
    %103 = vdwg.mxu0
    %v104 = vsel %vm30, %v101, 0.0
    %v105 = vrot.slane %v104, 4
    %v106 = vadd.f32 %v104, %v105
    %v107 = vrot.slane %v106, 2
    %v108 = vadd.f32 %v106, %v107
    %v109 = vrot.slane %v108, 1
    %v110 = vadd.f32 %v108, %v109
    %v111 = vrcp.pop 8.0
    %v112 = vmul.f32 %v110, %v111
    %v113 = vmul.f32 %v101, %v101
    %v114 = vsel %vm30, %v113, 0.0
    %v115 = vrot.slane %v114, 4
    %v116 = vadd.f32 %v114, %v115
    %v117 = vrot.slane %v116, 2
    %v118 = vadd.f32 %v116, %v117
    %v119 = vrot.slane %v118, 1
    %v120 = vadd.f32 %v118, %v119
    %v121 = vmul.f32 %v120, %v111
    %v122 = vmul.f32 %v112, %v112
    %v123 = vsub.f32 %v121, %v122
    %v124 = vmax.f32 %v123, 0.0
    %v125 = vsub.f32 %v101, %v112
    %v126 = vadd.f32 %v124, 1e-05
    %v127 = vrsqrt.pop %v126
    %v128 = vmul.f32 %v125, %v127
    %v129 = vand.u32 2147483647, %v128
    %v130 = vsel %vm30, %v129, -inf
    %131 = vmax.xlane.f32.xlu0 %v130
    %v132 = vpop.xlane.xlu0 %131
    %v133 = vmul.f32 %v132, 3.0
    %v134 = vsel %vm22, %v133, %v128
    %s135 = scalar_lea.vmem %s2, 24
    %v136 = vld [vmem:[%s135] sm:$0xff]
    %v137 = vld [vmem:[%s135 + $0x8] sm:$0xff]
    %v138 = vld [vmem:[%s135 + $0x10] sm:$0x1]
    %v139 = vlaneseq
    %v140 = vshrl.u32 %v139, 7
    %v141 = vsub.s32 0, %v140
    %v142 = vrot.slane %v138, %v141
    %v144 = vsel %vm30, %v134, 0
    %146 = vmatprep.subr.mxu0 0.0
    %147 = vmatpush1.msra.mxu0 %v136
    %148 = vmatprep.subr.mxu0 0.0
    %149 = vmatpush1.msra.mxu0 %v137
    %150 = vmatprep.subr.mxu0 0.0
    %151 = vmatpush1.msra.mxu0 0.0
    %152 = vmatprep.subr.mxu0 0.0
    %153 = vmatpush1.msra.mxu0 0.0
    %154 = vmatprep.subr.mxu0 0.0
    %155 = vmatpush1.msra.mxu0 0.0
    %156 = vmatprep.subr.mxu0 0.0
    %157 = vmatpush1.msra.mxu0 0.0
    %158 = vmatprep.subr.mxu0 0.0
    %159 = vmatpush1.msra.mxu0 0.0
    %160 = vmatprep.subr.mxu0 0.0
    %161 = vmatpush1.msra.mxu0 0.0
    %162 = vmatprep.subr.mxu0 0.0
    %163 = vmatpush1.msra.mxu0 0.0
    %164 = vmatprep.subr.mxu0 0.0
    %165 = vmatpush1.msra.mxu0 0.0
    %166 = vmatprep.subr.mxu0 0.0
    %167 = vmatpush1.msra.mxu0 0.0
    %168 = vmatprep.subr.mxu0 0.0
    %169 = vmatpush1.msra.mxu0 0.0
    %170 = vmatprep.subr.mxu0 0.0
    %171 = vmatpush1.msra.mxu0 0.0
    %172 = vmatprep.subr.mxu0 0.0
    %173 = vmatpush1.msra.mxu0 0.0
    %174 = vmatprep.subr.mxu0 0.0
    %175 = vmatpush1.msra.mxu0 0.0
    %176 = vmatprep.subr.mxu0 0.0
    %177 = vmatpush1.msra.mxu0 0.0
    %178 = vmatprep.subr.mxu0 0.0
    %179 = vmatpush1.msra.mxu0 0.0
    %180 = vmatprep.subr.mxu0 0.0
    %181 = vmatpush1.msra.mxu0 0.0
    %182 = vmatprep.subr.mxu0 0.0
    %183 = vmatpush1.msra.mxu0 0.0
    %184 = vmatprep.subr.mxu0 0.0
    %185 = vmatpush1.msra.mxu0 0.0
    %186 = vmatprep.subr.mxu0 0.0
    %187 = vmatpush1.msra.mxu0 0.0
    %188 = vmatprep.subr.mxu0 0.0
    %189 = vmatpush1.msra.mxu0 0.0
    %190 = vmatprep.subr.mxu0 0.0
    %191 = vmatpush1.msra.mxu0 0.0
    %192 = vmatprep.subr.mxu0 0.0
    %193 = vmatpush1.msra.mxu0 0.0
    %194 = vmatprep.subr.mxu0 0.0
    %195 = vmatpush1.msra.mxu0 0.0
    %196 = vmatprep.subr.mxu0 0.0
    %197 = vmatpush1.msra.mxu0 0.0
    %198 = vmatprep.subr.mxu0 0.0
    %199 = vmatpush1.msra.mxu0 0.0
    %200 = vmatprep.subr.mxu0 0.0
    %201 = vmatpush1.msra.mxu0 0.0
    %202 = vmatprep.subr.mxu0 0.0
    %203 = vmatpush1.msra.mxu0 0.0
    %204 = vmatprep.subr.mxu0 0.0
    %205 = vmatpush1.msra.mxu0 0.0
    %206 = vmatprep.subr.mxu0 0.0
    %207 = vmatpush1.msra.mxu0 0.0
    %208 = vmatprep.subr.mxu0 0.0
    %209 = vmatpush1.msra.mxu0 0.0
    %210 = vmatprep.mubr.f32.mxu0 0.0
    %211 = vmatmul.mubr.f32.gmra.mrb[0].mxu0 %v144
    %v212 = vpop.f32.mrb[0].mxu0
    %v213 = vadd.f32 %v142, %v212
    %v214 = vpop.f32.mrb[0].mxu0
    %215 = vdwg.mxu0
    %v216 = vsel %vm30, %v213, 0.0
    %v217 = vrot.slane %v216, 4
    %v218 = vadd.f32 %v216, %v217
    %v219 = vrot.slane %v218, 2
    %v220 = vadd.f32 %v218, %v219
    %v221 = vrot.slane %v220, 1
    %v222 = vadd.f32 %v220, %v221
    %v223 = vmul.f32 %v222, %v111
    %v224 = vmul.f32 %v213, %v213
    %v225 = vsel %vm30, %v224, 0.0
    %v226 = vrot.slane %v225, 4
    %v227 = vadd.f32 %v225, %v226
    %v228 = vrot.slane %v227, 2
    %v229 = vadd.f32 %v227, %v228
    %v230 = vrot.slane %v229, 1
    %v231 = vadd.f32 %v229, %v230
    %v232 = vmul.f32 %v231, %v111
    %v233 = vmul.f32 %v223, %v223
    %v234 = vsub.f32 %v232, %v233
    %v235 = vmax.f32 %v234, 0.0
    %v236 = vsub.f32 %v213, %v223
    %v237 = vadd.f32 %v235, 1e-05
    %v238 = vrsqrt.pop %v237
    %v239 = vmul.f32 %v236, %v238
    %v240 = vand.u32 2147483647, %v239
    %v241 = vsel %vm30, %v240, -inf
    %242 = vmax.xlane.f32.xlu0 %v241
    %v243 = vpop.xlane.xlu0 %242
    %v244 = vmul.f32 %v243, 3.0
    %v245 = vsel %vm22, %v244, %v239
    %s246 = scalar_lea.vmem %s2, 48
    %v247 = vld [vmem:[%s246] sm:$0xff]
    %v248 = vld [vmem:[%s246 + $0x8] sm:$0xff]
    %v249 = vld [vmem:[%s246 + $0x10] sm:$0x1]
    %v250 = vlaneseq
    %v251 = vshrl.u32 %v250, 7
    %v252 = vsub.s32 0, %v251
    %v253 = vrot.slane %v249, %v252
    %v255 = vsel %vm30, %v245, 0
    %257 = vmatprep.subr.mxu0 0.0
    %258 = vmatpush1.msra.mxu0 %v247
    %259 = vmatprep.subr.mxu0 0.0
    %260 = vmatpush1.msra.mxu0 %v248
    %261 = vmatprep.subr.mxu0 0.0
    %262 = vmatpush1.msra.mxu0 0.0
    %263 = vmatprep.subr.mxu0 0.0
    %264 = vmatpush1.msra.mxu0 0.0
    %265 = vmatprep.subr.mxu0 0.0
    %266 = vmatpush1.msra.mxu0 0.0
    %267 = vmatprep.subr.mxu0 0.0
    %268 = vmatpush1.msra.mxu0 0.0
    %269 = vmatprep.subr.mxu0 0.0
    %270 = vmatpush1.msra.mxu0 0.0
    %271 = vmatprep.subr.mxu0 0.0
    %272 = vmatpush1.msra.mxu0 0.0
    %273 = vmatprep.subr.mxu0 0.0
    %274 = vmatpush1.msra.mxu0 0.0
    %275 = vmatprep.subr.mxu0 0.0
    %276 = vmatpush1.msra.mxu0 0.0
    %277 = vmatprep.subr.mxu0 0.0
    %278 = vmatpush1.msra.mxu0 0.0
    %279 = vmatprep.subr.mxu0 0.0
    %280 = vmatpush1.msra.mxu0 0.0
    %281 = vmatprep.subr.mxu0 0.0
    %282 = vmatpush1.msra.mxu0 0.0
    %283 = vmatprep.subr.mxu0 0.0
    %284 = vmatpush1.msra.mxu0 0.0
    %285 = vmatprep.subr.mxu0 0.0
    %286 = vmatpush1.msra.mxu0 0.0
    %287 = vmatprep.subr.mxu0 0.0
    %288 = vmatpush1.msra.mxu0 0.0
    %289 = vmatprep.subr.mxu0 0.0
    %290 = vmatpush1.msra.mxu0 0.0
    %291 = vmatprep.subr.mxu0 0.0
    %292 = vmatpush1.msra.mxu0 0.0
    %293 = vmatprep.subr.mxu0 0.0
    %294 = vmatpush1.msra.mxu0 0.0
    %295 = vmatprep.subr.mxu0 0.0
    %296 = vmatpush1.msra.mxu0 0.0
    %297 = vmatprep.subr.mxu0 0.0
    %298 = vmatpush1.msra.mxu0 0.0
    %299 = vmatprep.subr.mxu0 0.0
    %300 = vmatpush1.msra.mxu0 0.0
    %301 = vmatprep.subr.mxu0 0.0
    %302 = vmatpush1.msra.mxu0 0.0
    %303 = vmatprep.subr.mxu0 0.0
    %304 = vmatpush1.msra.mxu0 0.0
    %305 = vmatprep.subr.mxu0 0.0
    %306 = vmatpush1.msra.mxu0 0.0
    %307 = vmatprep.subr.mxu0 0.0
    %308 = vmatpush1.msra.mxu0 0.0
    %309 = vmatprep.subr.mxu0 0.0
    %310 = vmatpush1.msra.mxu0 0.0
    %311 = vmatprep.subr.mxu0 0.0
    %312 = vmatpush1.msra.mxu0 0.0
    %313 = vmatprep.subr.mxu0 0.0
    %314 = vmatpush1.msra.mxu0 0.0
    %315 = vmatprep.subr.mxu0 0.0
    %316 = vmatpush1.msra.mxu0 0.0
    %317 = vmatprep.subr.mxu0 0.0
    %318 = vmatpush1.msra.mxu0 0.0
    %319 = vmatprep.subr.mxu0 0.0
    %320 = vmatpush1.msra.mxu0 0.0
    %321 = vmatprep.mubr.f32.mxu0 0.0
    %322 = vmatmul.mubr.f32.gmra.mrb[0].mxu0 %v255
    %v323 = vpop.f32.mrb[0].mxu0
    %v324 = vadd.f32 %v253, %v323
    %v325 = vpop.f32.mrb[0].mxu0
    %326 = vdwg.mxu0
    %v327 = vsel %vm30, %v324, 0.0
    %v328 = vrot.slane %v327, 4
    %v329 = vadd.f32 %v327, %v328
    %v330 = vrot.slane %v329, 2
    %v331 = vadd.f32 %v329, %v330
    %v332 = vrot.slane %v331, 1
    %v333 = vadd.f32 %v331, %v332
    %v334 = vmul.f32 %v333, %v111
    %v335 = vmul.f32 %v324, %v324
    %v336 = vsel %vm30, %v335, 0.0
    %v337 = vrot.slane %v336, 4
    %v338 = vadd.f32 %v336, %v337
    %v339 = vrot.slane %v338, 2
    %v340 = vadd.f32 %v338, %v339
    %v341 = vrot.slane %v340, 1
    %v342 = vadd.f32 %v340, %v341
    %v343 = vmul.f32 %v342, %v111
    %v344 = vmul.f32 %v334, %v334
    %v345 = vsub.f32 %v343, %v344
    %v346 = vmax.f32 %v345, 0.0
    %v347 = vsub.f32 %v324, %v334
    %v348 = vadd.f32 %v346, 1e-05
    %v349 = vrsqrt.pop %v348
    %v350 = vmul.f32 %v347, %v349
    %v351 = vand.u32 2147483647, %v350
    %v352 = vsel %vm30, %v351, -inf
    %353 = vmax.xlane.f32.xlu0 %v352
    %v354 = vpop.xlane.xlu0 %353
    %v355 = vmul.f32 %v354, 4.0
    %v356 = vsel %vm22, %v355, %v350
    %s357 = scalar_lea.vmem %s2, 72
    %v358 = vld [vmem:[%s357] sm:$0xff]
    %v359 = vld [vmem:[%s357 + $0x8] sm:$0xff]
    %v360 = vld [vmem:[%s357 + $0x10] sm:$0x1]
    %v361 = vlaneseq
    %v362 = vshrl.u32 %v361, 7
    %v363 = vsub.s32 0, %v362
    %v364 = vrot.slane %v360, %v363
    %v366 = vsel %vm30, %v356, 0
    %368 = vmatprep.subr.mxu0 0.0
    %369 = vmatpush1.msra.mxu0 %v358
    %370 = vmatprep.subr.mxu0 0.0
    %371 = vmatpush1.msra.mxu0 %v359
    %372 = vmatprep.subr.mxu0 0.0
    %373 = vmatpush1.msra.mxu0 0.0
    %374 = vmatprep.subr.mxu0 0.0
    %375 = vmatpush1.msra.mxu0 0.0
    %376 = vmatprep.subr.mxu0 0.0
    %377 = vmatpush1.msra.mxu0 0.0
    %378 = vmatprep.subr.mxu0 0.0
    %379 = vmatpush1.msra.mxu0 0.0
    %380 = vmatprep.subr.mxu0 0.0
    %381 = vmatpush1.msra.mxu0 0.0
    %382 = vmatprep.subr.mxu0 0.0
    %383 = vmatpush1.msra.mxu0 0.0
    %384 = vmatprep.subr.mxu0 0.0
    %385 = vmatpush1.msra.mxu0 0.0
    %386 = vmatprep.subr.mxu0 0.0
    %387 = vmatpush1.msra.mxu0 0.0
    %388 = vmatprep.subr.mxu0 0.0
    %389 = vmatpush1.msra.mxu0 0.0
    %390 = vmatprep.subr.mxu0 0.0
    %391 = vmatpush1.msra.mxu0 0.0
    %392 = vmatprep.subr.mxu0 0.0
    %393 = vmatpush1.msra.mxu0 0.0
    %394 = vmatprep.subr.mxu0 0.0
    %395 = vmatpush1.msra.mxu0 0.0
    %396 = vmatprep.subr.mxu0 0.0
    %397 = vmatpush1.msra.mxu0 0.0
    %398 = vmatprep.subr.mxu0 0.0
    %399 = vmatpush1.msra.mxu0 0.0
    %400 = vmatprep.subr.mxu0 0.0
    %401 = vmatpush1.msra.mxu0 0.0
    %402 = vmatprep.subr.mxu0 0.0
    %403 = vmatpush1.msra.mxu0 0.0
    %404 = vmatprep.subr.mxu0 0.0
    %405 = vmatpush1.msra.mxu0 0.0
    %406 = vmatprep.subr.mxu0 0.0
    %407 = vmatpush1.msra.mxu0 0.0
    %408 = vmatprep.subr.mxu0 0.0
    %409 = vmatpush1.msra.mxu0 0.0
    %410 = vmatprep.subr.mxu0 0.0
    %411 = vmatpush1.msra.mxu0 0.0
    %412 = vmatprep.subr.mxu0 0.0
    %413 = vmatpush1.msra.mxu0 0.0
    %414 = vmatprep.subr.mxu0 0.0
    %415 = vmatpush1.msra.mxu0 0.0
    %416 = vmatprep.subr.mxu0 0.0
    %417 = vmatpush1.msra.mxu0 0.0
    %418 = vmatprep.subr.mxu0 0.0
    %419 = vmatpush1.msra.mxu0 0.0
    %420 = vmatprep.subr.mxu0 0.0
    %421 = vmatpush1.msra.mxu0 0.0
    %422 = vmatprep.subr.mxu0 0.0
    %423 = vmatpush1.msra.mxu0 0.0
    %424 = vmatprep.subr.mxu0 0.0
    %425 = vmatpush1.msra.mxu0 0.0
    %426 = vmatprep.subr.mxu0 0.0
    %427 = vmatpush1.msra.mxu0 0.0
    %428 = vmatprep.subr.mxu0 0.0
    %429 = vmatpush1.msra.mxu0 0.0
    %430 = vmatprep.subr.mxu0 0.0
    %431 = vmatpush1.msra.mxu0 0.0
    %432 = vmatprep.mubr.f32.mxu0 0.0
    %433 = vmatmul.mubr.f32.gmra.mrb[0].mxu0 %v366
    %v434 = vpop.f32.mrb[0].mxu0
    %v435 = vadd.f32 %v364, %v434
    %v436 = vpop.f32.mrb[0].mxu0
    %437 = vdwg.mxu0
    %v438 = vsel %vm30, %v435, 0.0
    %v439 = vrot.slane %v438, 4
    %v440 = vadd.f32 %v438, %v439
    %v441 = vrot.slane %v440, 2
    %v442 = vadd.f32 %v440, %v441
    %v443 = vrot.slane %v442, 1
    %v444 = vadd.f32 %v442, %v443
    %v445 = vmul.f32 %v444, %v111
    %v446 = vmul.f32 %v435, %v435
    %v447 = vsel %vm30, %v446, 0.0
    %v448 = vrot.slane %v447, 4
    %v449 = vadd.f32 %v447, %v448
    %v450 = vrot.slane %v449, 2
    %v451 = vadd.f32 %v449, %v450
    %v452 = vrot.slane %v451, 1
    %v453 = vadd.f32 %v451, %v452
    %v454 = vmul.f32 %v453, %v111
    %v455 = vmul.f32 %v445, %v445
    %v456 = vsub.f32 %v454, %v455
    %v457 = vmax.f32 %v456, 0.0
    %v458 = vsub.f32 %v435, %v445
    %v459 = vadd.f32 %v457, 1e-05
    %v460 = vrsqrt.pop %v459
    %v461 = vmul.f32 %v458, %v460
    %v462 = vand.u32 2147483647, %v461
    %v463 = vsel %vm30, %v462, -inf
    %464 = vmax.xlane.f32.xlu0 %v463
    %v465 = vpop.xlane.xlu0 %464
    %v466 = vmul.f32 %v465, 4.0
    %v467 = vsel %vm22, %v466, %v461
    %v468 = vsel %vm30, %v467, -inf
    %469 = vmax.xlane.f32.xlu0 %v468
    %v470 = vpop.xlane.xlu0 %469
    %v471 = vsub.f32 %v467, %v470
    %v472 = vmul.f32 %v471, 1.442695
    %v473 = vpow.pop %v472
    %v474 = vsel %vm30, %v473, 0.0
    %475 = vadd.xlane.f32.xlu0 %v474
    %v476 = vpop.xlane.xlu0 %475
    %v477 = vrcp.pop %v476
    %v478 = vmul.f32 %v476, %v477
    %v479 = vsub.f32 2.0, %v478
    %v480 = vmul.f32 %v477, %v479
    %v481 = vmul.f32 %v473, %v480
    %482 = vst.msk [vmem:[#allocation2] sm:$0xff] %vm30, %v481
    // Predicated region
    $region14: #{dla_forward.1} parent=1 // pred_check
      _
    $region15: #{dla_forward.1} parent=1 // pred_check_branch
      %484 = sbr.rel (0) target = $region17
    $region16: #{dla_forward.1} parent=1 // pred_region
      %s486 = ssub.s32 128, 128
      %487 = vsyncadd [#allocation3], %s486
      %s489 = sshll.u32 [#allocation2], 4
      %s490 = int_to_ptr.vmem [resolvable:$true] %s489
      %492 = dma.vmem_to_hbm [thread:$0]  %s490, 128, %s3, [#allocation3]
    $region17: #{dla_forward.1} parent=1 // pred_fallthru
      _
    // Predicated region
    $region18: #{dla_forward.1} parent=1 // pred_check
      _
    $region19: #{dla_forward.1} parent=1 // pred_check_branch
      %494 = sbr.rel (0) target = $region21
    $region20: #{dla_forward.1} parent=1 // pred_region
      %495 = dma.done [#allocation3], 128
    $region21: #{dla_forward.1} parent=1 // pred_fallthru
      _
    %496 = vsyncpa [#allocation3], 1

</llo_original>
